<compile_context>
chip_gen: v5e
topology: v5e:2x2
jax: 0.10.0
libtpu: 0.0.40
codegen_flags: <defaults>
</compile_context>

<pallas_src>
import numpy as np
import jax
import jax.numpy as jnp
from jax.experimental import pallas as pl
from jax.experimental.pallas import tpu as pltpu

LEAKY_SLOPE = 0.01   # PyTorch nn.LeakyReLU() default negative_slope
LANE = 128
PACK_EXTRA = 28      # packed-param columns beyond nb: b1(1) + W2^T(15) + b2(1) + W3^T(10) + b3(1)


# ----------------------------- Pallas kernel -------------------------------- #
def _ann_kernel(yt_ref, p_ref, out_ref):
    # yt_ref : (nb, TM)        raw spline knot values, batch on the 128-lane axis
    # p_ref  : (15, nb + 28)   packed [W1_eff^T | b1 | W2^T | b2 | W3^T | b3]
    # out_ref: (1, TM)         lane-dense output tile
    nb = p_ref.shape[1] - PACK_EXTRA
    p = p_ref[...]
    w1t = p[:, :nb]                        # (15, nb)  = (E @ W1)^T  (spline folded in)
    b1 = p[:, nb:nb + 1]                   # (15, 1)
    w2t = p[:10, nb + 1:nb + 16]           # (10, 15)
    b2 = p[:10, nb + 16:nb + 17]           # (10, 1)
    w3t = p[:1, nb + 17:nb + 27]           # (1, 10)
    b3 = p[:1, nb + 27:nb + 28]            # (1, 1)

    h = jnp.dot(w1t, yt_ref[...], preferred_element_type=jnp.float32) + b1   # (15, TM)
    h = jnp.where(h > 0, h, LEAKY_SLOPE * h)
    h = jnp.dot(w2t, h, preferred_element_type=jnp.float32) + b2             # (10, TM)
    h = jnp.where(h > 0, h, LEAKY_SLOPE * h)
    out_ref[...] = jnp.dot(w3t, h, preferred_element_type=jnp.float32) + b3  # (1, TM)


# ----------------------------- glue: spline setup ---------------------------- #
def natural_cubic_spline_coeffs(y, h):
    """Natural cubic spline coefficients on uniform knots (JAX glue, not hot path).

    y: (rows, nb) values at knots x_j = j*h.  Returns a,b,c,d each (rows, nb-1) so that
    S(x) = a + b*dx + c*dx^2 + d*dx^3 on segment j with dx = x - x_j.
    """
    rows, nb = y.shape
    rhs = 6.0 * (y[:, :-2] - 2.0 * y[:, 1:-1] + y[:, 2:]) / (h * h)   # (rows, nb-2)
    n = nb - 2
    A = 4.0 * jnp.eye(n) + jnp.eye(n, k=1) + jnp.eye(n, k=-1)
    m_inner = jnp.linalg.solve(A, rhs.T).T                            # (rows, nb-2)
    m = jnp.pad(m_inner, ((0, 0), (1, 1)))                            # natural BCs
    a = y[:, :-1]
    b = (y[:, 1:] - y[:, :-1]) / h - h * (2.0 * m[:, :-1] + m[:, 1:]) / 6.0
    c = m[:, :-1] / 2.0
    d = (m[:, 1:] - m[:, :-1]) / (6.0 * h)
    return a, b, c, d


def _spline_eval_matrix(nb, raw_index):
    """E (nb, F): spline evaluation at t=sigmoid(raw_index) is linear in the knot
    values, so vals(size,F) = y(size,nb) @ E.  Built once from the identity basis;
    cost is independent of batch size."""
    h = 1.0 / (nb - 1)
    t = jax.nn.sigmoid(raw_index)                                     # index_value(), (F,)
    a, b, c, d = natural_cubic_spline_coeffs(jnp.eye(nb, dtype=jnp.float32), h)
    seg = jnp.clip(jnp.floor(t / h).astype(jnp.int32), 0, nb - 2)     # (F,)
    dx = t - seg.astype(jnp.float32) * h                              # (F,)
    return a[:, seg] + b[:, seg] * dx + c[:, seg] * dx**2 + d[:, seg] * dx**3  # (nb, F)


def _pack_params(E, params):
    """Pack [W1_eff^T | b1 | W2^T | b2 | W3^T | b3] into one (15, nb+28) array."""
    w1t = (E @ params["w1"]).T                                        # (15, nb)
    nb = w1t.shape[1]
    p = jnp.zeros((15, nb + PACK_EXTRA), jnp.float32)
    p = p.at[:, :nb].set(w1t)
    p = p.at[:, nb].set(params["b1"])
    p = p.at[:10, nb + 1:nb + 16].set(params["w2"].T)
    p = p.at[:10, nb + 16].set(params["b2"])
    p = p.at[:1, nb + 17:nb + 27].set(params["w3"].T)
    p = p.at[0, nb + 27].set(params["b3"][0])
    return p


def _round_up(x, m):
    return ((x + m - 1) // m) * m


def _pick_tile(size, nb, cap=32768, vmem_budget_bytes=20 << 20):
    """Row tile (lane count): multiple of 128, as large as a ~20 MiB VMEM budget allows
    (double-buffered input + output + activation headroom), capped at `cap`."""
    per_col = (2 * nb + 2 + 40) * 4          # bytes per lane column (f32), conservative
    cap = max(LANE, min(cap, (vmem_budget_bytes // per_col) // LANE * LANE))
    tm = min(cap, _round_up(size, LANE))
    grid = _round_up(size, tm) // tm
    # v7x: two TensorCores split the "parallel" axis; prefer an even step count when
    # multi-step so both cores get equal work.  The extra ~0.35us step is negligible
    # on single-core v5e/v6e.
    if grid > 1 and grid % 2 == 1:
        grid += 1
        tm = max(LANE, _round_up(-(-size // grid), LANE))
    padded = _round_up(size, tm)
    return tm, padded


# ----------------------------- wrapper --------------------------------------- #
def ann_forward(spline_y, params, tile_cap=32768):
    """Equivalent of ANN.forward(spline, size); spline_y is (size, num_bands)."""
    size, nb = spline_y.shape

    E = _spline_eval_matrix(nb, params["raw_index"])                  # (nb, F), batch-free
    p_packed = _pack_params(E, params)                                # (15, nb+28)

    tm, padded = _pick_tile(size, nb, cap=tile_cap)
    # Pad the batch axis BEFORE the transpose: the kernel input is built already padded
    # in a single pass (no second full-array pad of the streamed operand).
    yt = jnp.pad(spline_y, ((0, padded - size), (0, 0))).T            # (nb, padded)

    out = pl.pallas_call(
        _ann_kernel,
        out_shape=jax.ShapeDtypeStruct((1, padded), jnp.float32),
        grid_spec=pltpu.PrefetchScalarGridSpec(
            num_scalar_prefetch=0,
            grid=(padded // tm,),
            in_specs=[
                pl.BlockSpec((nb, tm), lambda i: (0, i)),             # streamed y^T tile
                pl.BlockSpec((15, nb + PACK_EXTRA), lambda i: (0, 0)),  # resident packed params
            ],
            out_specs=pl.BlockSpec((1, tm), lambda i: (0, i)),        # lane-dense output
        ),
        compiler_params=pltpu.CompilerParams(
            dimension_semantics=("parallel",),
            vmem_limit_bytes=32 * 1024 * 1024),
    )(yt, p_packed)

    return out[0, :size]                                              # soc_hat.reshape(-1)


# ----------------------------- reference (pure JAX) --------------------------- #
def ann_forward_ref(spline_y, params):
    nb = spline_y.shape[1]
    h = 1.0 / (nb - 1)
    t = jax.nn.sigmoid(params["raw_index"])
    a, b, c, d = natural_cubic_spline_coeffs(spline_y, h)
    seg = jnp.clip(jnp.floor(t / h).astype(jnp.int32), 0, nb - 2)
    dx = t - seg.astype(jnp.float32) * h
    vals = a[:, seg] + b[:, seg] * dx + c[:, seg] * dx**2 + d[:, seg] * dx**3
    z = vals @ params["w1"] + params["b1"]
    z = jnp.where(z > 0, z, LEAKY_SLOPE * z)
    z = z @ params["w2"] + params["b2"]
    z = jnp.where(z > 0, z, LEAKY_SLOPE * z)
    o = z @ params["w3"] + params["b3"]
    return o.reshape(-1)


# ----------------------------- parameter init --------------------------------- #
def init_params(key, target_feature_size):
    F = target_feature_size
    # BandIndex raw_index init: inverse_sigmoid(linspace(0.001, 0.99, F+2)[1:-1])
    init_vals = jnp.linspace(0.001, 0.99, F + 2)
    raw_index = -jnp.log(1.0 / init_vals[1:-1] - 1.0)

    keys = jax.random.split(key, 6)

    def linear(kw, kb, fan_in, fan_out):
        bound = 1.0 / np.sqrt(fan_in)  # PyTorch nn.Linear default init
        w = jax.random.uniform(kw, (fan_in, fan_out), jnp.float32, -bound, bound)
        b = jax.random.uniform(kb, (fan_out,), jnp.float32, -bound, bound)
        return w, b

    w1, b1 = linear(keys[0], keys[1], F, 15)
    w2, b2 = linear(keys[2], keys[3], 15, 10)
    w3, b3 = linear(keys[4], keys[5], 10, 1)
    return dict(raw_index=raw_index.astype(jnp.float32),
                w1=w1, b1=b1, w2=w2, b2=b2, w3=w3, b3=b3)


# ----------------------------- main ------------------------------------------ #
if __name__ == "__main__":
    key = jax.random.PRNGKey(0)
    k_data, k_param, k_data2 = jax.random.split(key, 3)

    num_bands, target_feature_size = 32, 8
    params = init_params(k_param, target_feature_size)

    # Small batch (single grid step)
    size = 16
    spline_y = jax.random.normal(k_data, (size, num_bands), dtype=jnp.float32)
    out = jax.block_until_ready(ann_forward(spline_y, params))
    ref = ann_forward_ref(spline_y, params)
    np.testing.assert_allclose(np.asarray(out), np.asarray(ref), rtol=5e-3, atol=5e-3)
    assert out.shape == (size,)

    # Larger batch with padding (single big tile under the default cap)
    size2 = 300
    spline_y2 = jax.random.normal(k_data2, (size2, num_bands), dtype=jnp.float32)
    out2 = jax.block_until_ready(ann_forward(spline_y2, params))
    ref2 = ann_forward_ref(spline_y2, params)
    np.testing.assert_allclose(np.asarray(out2), np.asarray(ref2), rtol=5e-3, atol=5e-3)
    assert out2.shape == (size2,)

    # Same data, small tile cap -> exercises the multi-step grid / pipelined path
    out3 = jax.block_until_ready(ann_forward(spline_y2, params, tile_cap=128))
    np.testing.assert_allclose(np.asarray(out3), np.asarray(ref2), rtol=5e-3, atol=5e-3)

    print("KERNEL_OK")
</pallas_src>

<mosaic_0001>
module attributes {stable_mosaic.version = 11 : i64} {
  func.func @_ann_kernel(%arg0: i32, %arg1: memref<32x128xf32, #tpu.memory_space<vmem>>, %arg2: memref<15x60xf32, #tpu.memory_space<vmem>>, %arg3: memref<1x128xf32, #tpu.memory_space<vmem>>) attributes {dimension_semantics = [#tpu.dimension_semantics<parallel>], iteration_bounds = array<i64: 1>, scalar_prefetch = 0 : i64, scratch_operands = 0 : i64, tpu.core_type = #tpu.core_type<tc>, window_params = [{transform_indices = @transform_0, window_bounds = array<i64: 32, 128>}, {pipeline_mode = #tpu.pipeline_mode<synchronous>, transform_indices = @transform_1, window_bounds = array<i64: 15, 60>}, {transform_indices = @transform_2, window_bounds = array<i64: 1, 128>}]} {
    %c0 = arith.constant 0 : index
    %c0_0 = arith.constant 0 : index
    %0 = vector.load %arg2[%c0, %c0_0] : memref<15x60xf32, #tpu.memory_space<vmem>>, vector<15x60xf32>
    %1 = vector.extract_strided_slice %0 {offsets = [0, 0], sizes = [15, 32], strides = [1, 1]} : vector<15x60xf32> to vector<15x32xf32>
    %2 = vector.extract_strided_slice %0 {offsets = [0, 32], sizes = [15, 1], strides = [1, 1]} : vector<15x60xf32> to vector<15x1xf32>
    %3 = vector.extract_strided_slice %0 {offsets = [0, 33], sizes = [10, 15], strides = [1, 1]} : vector<15x60xf32> to vector<10x15xf32>
    %4 = vector.extract_strided_slice %0 {offsets = [0, 48], sizes = [10, 1], strides = [1, 1]} : vector<15x60xf32> to vector<10x1xf32>
    %5 = vector.extract_strided_slice %0 {offsets = [0, 49], sizes = [1, 10], strides = [1, 1]} : vector<15x60xf32> to vector<1x10xf32>
    %6 = vector.extract_strided_slice %0 {offsets = [0, 59], sizes = [1, 1], strides = [1, 1]} : vector<15x60xf32> to vector<1x1xf32>
    %c0_1 = arith.constant 0 : index
    %c0_2 = arith.constant 0 : index
    %7 = vector.load %arg1[%c0_1, %c0_2] : memref<32x128xf32, #tpu.memory_space<vmem>>, vector<32x128xf32>
    %cst = arith.constant dense<0.000000e+00> : vector<15x128xf32>
    %8 = tpu.matmul %1, %7, %cst {dimension_numbers = #tpu.dot_dimension_numbers<[1], [0], [0], [1], [0, 0, 1, 1], [], []>} : vector<15x32xf32>, vector<32x128xf32>, vector<15x128xf32> -> vector<15x128xf32>
    %9 = vector.broadcast %2 : vector<15x1xf32> to vector<15x128xf32>
    %10 = arith.addf %8, %9 : vector<15x128xf32>
    %cst_3 = arith.constant 0.000000e+00 : f32
    %11 = vector.broadcast %cst_3 : f32 to vector<15x128xf32>
    %12 = arith.cmpf ogt, %10, %11 : vector<15x128xf32>
    %cst_4 = arith.constant 0.00999999977 : f32
    %13 = vector.broadcast %cst_4 : f32 to vector<15x128xf32>
    %14 = arith.mulf %13, %10 : vector<15x128xf32>
    %15 = arith.select %12, %10, %14 : vector<15x128xi1>, vector<15x128xf32>
    %cst_5 = arith.constant dense<0.000000e+00> : vector<10x128xf32>
    %16 = tpu.matmul %3, %15, %cst_5 {dimension_numbers = #tpu.dot_dimension_numbers<[1], [0], [0], [1], [0, 0, 1, 1], [], []>} : vector<10x15xf32>, vector<15x128xf32>, vector<10x128xf32> -> vector<10x128xf32>
    %17 = vector.broadcast %4 : vector<10x1xf32> to vector<10x128xf32>
    %18 = arith.addf %16, %17 : vector<10x128xf32>
    %cst_6 = arith.constant 0.000000e+00 : f32
    %19 = vector.broadcast %cst_6 : f32 to vector<10x128xf32>
    %20 = arith.cmpf ogt, %18, %19 : vector<10x128xf32>
    %cst_7 = arith.constant 0.00999999977 : f32
    %21 = vector.broadcast %cst_7 : f32 to vector<10x128xf32>
    %22 = arith.mulf %21, %18 : vector<10x128xf32>
    %23 = arith.select %20, %18, %22 : vector<10x128xi1>, vector<10x128xf32>
    %cst_8 = arith.constant dense<0.000000e+00> : vector<1x128xf32>
    %24 = tpu.matmul %5, %23, %cst_8 {dimension_numbers = #tpu.dot_dimension_numbers<[1], [0], [0], [1], [0, 0, 1, 1], [], []>} : vector<1x10xf32>, vector<10x128xf32>, vector<1x128xf32> -> vector<1x128xf32>
    %25 = vector.broadcast %6 : vector<1x1xf32> to vector<1x128xf32>
    %26 = arith.addf %24, %25 : vector<1x128xf32>
    %c0_9 = arith.constant 0 : index
    %c0_10 = arith.constant 0 : index
    %27 = vector.load %arg3[%c0_9, %c0_10] : memref<1x128xf32, #tpu.memory_space<vmem>>, vector<1x128xf32>
    tpu.vector_store %arg3[%c0_9, %c0_10], %26 {strides = array<i32>} : memref<1x128xf32, #tpu.memory_space<vmem>>, vector<1x128xf32>,
    return
  }
  func.func @transform_0(%arg0: i32) -> (i32, i32) {
    %c0_i32 = arith.constant 0 : i32
    %c0_i32_0 = arith.constant 0 : i32
    return %c0_i32, %arg0 : i32, i32
  }
  func.func @transform_1(%arg0: i32) -> (i32, i32) {
    %c0_i32 = arith.constant 0 : i32
    %c0_i32_0 = arith.constant 0 : i32
    %c0_i32_1 = arith.constant 0 : i32
    return %c0_i32, %c0_i32_0 : i32, i32
  }
  func.func @transform_2(%arg0: i32) -> (i32, i32) {
    %c0_i32 = arith.constant 0 : i32
    %c0_i32_0 = arith.constant 0 : i32
    return %c0_i32, %arg0 : i32, i32
  }
}

</mosaic_0001>

<llo_original>
// kernel: tpu_custom_call.1
$region0: #{tpu_custom_call.1}
  #allocation0 [shape = 'u32[]', space=smem, size = 0x4, offset = 0x4, fixed_abs, tag = 'smem constant byte address 0x4 - core index']
  #allocation1 [shape = 'u32[72,128]{1,0:T(1,128)}', space=vmem, size = 0x9000, scoped, tag = 'internal scratch']
  %s0 = inlined_call_operand.hbm [shape: f32[32,128], index: 0, kind: input, shape index: {}]
  %s1 = inlined_call_operand.hbm [shape: f32[15,60], index: 1, kind: input, shape index: {}]
  %s2 = inlined_call_operand.hbm [shape: f32[1,128], index: 2, kind: output, shape index: {}]
  %s3 = sld [smem:[#allocation0]]
  $region26: #{tpu_custom_call.1} parent=0
    _
  %s5 = ssub.s32 1, %s3
  %s6 = scalar_select 0, %s5, %s3
  $region1: #{tpu_custom_call.1} parent=0
    #allocation2 [shape = 'u8[16384]{0}', space=vmem, size = 0x4000, scoped, tag = 'input window, operand 0, single buffered']
    #allocation3 [shape = 's32[1]{0}', space=sflag, size = 0x4, scoped, tag = 'scoped memory for tpu_custom_call.1']
    #allocation4 [shape = 's32[1]{0}', space=sflag, size = 0x4, scoped, tag = 'scoped memory for tpu_custom_call.1']
    #allocation5 [shape = 'u8[8192]{0}', space=vmem, size = 0x2000, scoped, tag = 'input window, operand 1, single buffered']
    #allocation6 [shape = 's32[1]{0}', space=sflag, size = 0x4, scoped, tag = 'scoped memory for tpu_custom_call.1']
    #allocation7 [shape = 'u8[512]{0}', space=vmem, size = 0x400, scoped, tag = 'output window, operand 0, single buffered']
    %7 = vsyncpa [#allocation3], 0
    %8 = vsyncpa [#allocation6], 0
    %9 = vsyncpa [#allocation4], 0
    // Predicated region
    $region2: #{tpu_custom_call.1} parent=1 // pred_check
      _
    $region3: #{tpu_custom_call.1} parent=1 // pred_check_branch
      %11 = sbr.rel (0) target = $region5
    $region4: #{tpu_custom_call.1} parent=1 // pred_region
      %13 = vsyncadd [#allocation3], 0
      %s14 = sshll.u32 %s0, 4
      %s15 = int_to_ptr.hbm [resolvable:$true] %s14
      %s16 = sshll.u32 [#allocation2], 4
      %s17 = int_to_ptr.vmem [resolvable:$true] %s16
      %22 = dma.hbm_to_vmem [thread:$0]  %s15, 512, %s17, [#allocation3], 128, 128, 8
    $region5: #{tpu_custom_call.1} parent=1 // pred_fallthru
      _
    // Predicated region
    $region6: #{tpu_custom_call.1} parent=1 // pred_check
      _
    $region7: #{tpu_custom_call.1} parent=1 // pred_check_branch
      %24 = sbr.rel (0) target = $region9
    $region8: #{tpu_custom_call.1} parent=1 // pred_region
      %26 = vsyncadd [#allocation6], 0
      %s27 = sshll.u32 %s1, 4
      %s28 = int_to_ptr.hbm [resolvable:$true] %s27
      %s29 = sshll.u32 [#allocation5], 4
      %s30 = int_to_ptr.vmem [resolvable:$true] %s29
      %35 = dma.hbm_to_vmem [thread:$0]  %s28, 256, %s30, [#allocation6], 128, 128, 8
    $region9: #{tpu_custom_call.1} parent=1 // pred_fallthru
      _
    // Predicated region
    $region10: #{tpu_custom_call.1} parent=1 // pred_check
      _
    $region11: #{tpu_custom_call.1} parent=1 // pred_check_branch
      %37 = sbr.rel (0) target = $region13
    $region12: #{tpu_custom_call.1} parent=1 // pred_region
      %39 = dma.done [#allocation3], 512
    $region13: #{tpu_custom_call.1} parent=1 // pred_fallthru
      _
    // Predicated region
    $region14: #{tpu_custom_call.1} parent=1 // pred_check
      _
    $region15: #{tpu_custom_call.1} parent=1 // pred_check_branch
      %41 = sbr.rel (0) target = $region17
    $region16: #{tpu_custom_call.1} parent=1 // pred_region
      %43 = dma.done [#allocation6], 256
    $region17: #{tpu_custom_call.1} parent=1 // pred_fallthru
      _
    %v44 = vld [vmem:[#allocation5] sm:$0xff]
    %v45 = vld [vmem:[#allocation5 + $0x8] sm:$0x7f]
    %v46 = vld [vmem:[#allocation2] sm:$0xff]
    %v47 = vld [vmem:[#allocation2 + $0x8] sm:$0xff]
    %v48 = vld [vmem:[#allocation2 + $0x10] sm:$0xff]
    %v49 = vld [vmem:[#allocation2 + $0x18] sm:$0xff]
    %51 = vset.pattern.permute.xlu0 32
    %52 = vperm.xlu0 %51, %v44
    %v53 = vpop.permute.xlu0 %52
    %56 = vset.pattern.permute.xlu0 32
    %57 = vperm.xlu0 %56, %v45
    %v58 = vpop.permute.xlu0 %57
    %vm60 = vcmask 261120
    %v61 = vsel %vm60, %v44, 0
    %v63 = vsel %vm60, %v45, 0
    %65 = vmatpush.msra.mxu0 0.0
    %66 = vmatpush.msra.mxu0 0.0
    %67 = vmatpush.msra.mxu0 0.0
    %68 = vmatpush.msra.mxu0 0.0
    %69 = vmatpush.msra.mxu0 0.0
    %70 = vmatpush.msra.mxu0 0.0
    %71 = vmatpush.msra.mxu0 0.0
    %72 = vmatpush.msra.mxu0 0.0
    %73 = vmatpush.msra.mxu0 0.0
    %74 = vmatpush.msra.mxu0 0.0
    %75 = vmatpush.msra.mxu0 0.0
    %76 = vmatpush.msra.mxu0 0.0
    %77 = vmatpush.msra.mxu0 %v49
    %78 = vmatpush.msra.mxu0 %v48
    %79 = vmatpush.msra.mxu0 %v47
    %80 = vmatpush.msra.mxu0 %v46
    %81 = vmatmul.f32.gmra.mxu0 %v61
    %v82 = vpop.f32.mrf.mxu0
    %v83 = vadd.f32 %v53, %v82
    %84 = vmatmul.f32.gmra.mxu0 %v63
    %v85 = vpop.f32.mrf.mxu0
    %v86 = vadd.f32 %v58, %v85
    %87 = vdwg.mxu0
    %vm88 = vcmp.gt.f32.partialorder %v83, 0.0
    %vm89 = vcmp.gt.f32.partialorder %v86, 0.0
    %v90 = vmul.f32 %v83, 0.01
    %v91 = vmul.f32 %v86, 0.01
    %v92 = vsel %vm88, %v83, %v90
    %v93 = vsel %vm89, %v86, %v91
    %94 = vset.pattern.permute.xlu0 48
    %95 = vperm.xlu0 %94, %v44
    %v96 = vpop.permute.xlu0 %95
    %98 = vset.pattern.permute.xlu0 48
    %99 = vperm.xlu0 %98, %v45
    %v100 = vpop.permute.xlu0 %99
    %102 = vrot.lane.b32.xlu0 %v44, 95
    %v103 = vpop.permute.xlu0 %102
    %104 = vrot.lane.b32.xlu0 %v45, 95
    %v105 = vpop.permute.xlu0 %104
    %vm106 = vcmask 121856
    %v107 = vsel %vm106, %v103, 0
    %v109 = vsel %vm106, %v105, 0
    %vm111 = vcmask 1046528
    %v113 = vsel %vm111, %v93, 0
    %115 = vmatpush.msra.mxu0 0.0
    %116 = vmatpush.msra.mxu0 0.0
    %117 = vmatpush.msra.mxu0 0.0
    %118 = vmatpush.msra.mxu0 0.0
    %119 = vmatpush.msra.mxu0 0.0
    %120 = vmatpush.msra.mxu0 0.0
    %121 = vmatpush.msra.mxu0 0.0
    %122 = vmatpush.msra.mxu0 0.0
    %123 = vmatpush.msra.mxu0 0.0
    %124 = vmatpush.msra.mxu0 0.0
    %125 = vmatpush.msra.mxu0 0.0
    %126 = vmatpush.msra.mxu0 0.0
    %127 = vmatpush.msra.mxu0 0.0
    %128 = vmatpush.msra.mxu0 0.0
    %129 = vmatpush.msra.mxu0 %v113
    %130 = vmatpush.msra.mxu0 %v92
    %131 = vmatmul.f32.gmra.mxu0 %v107
    %v132 = vpop.f32.mrf.mxu0
    %v133 = vadd.f32 %v96, %v132
    %134 = vmatmul.f32.gmra.mxu0 %v109
    %v135 = vpop.f32.mrf.mxu0
    %v136 = vadd.f32 %v100, %v135
    %137 = vdwg.mxu0
    %vm138 = vcmp.gt.f32.partialorder %v133, 0.0
    %vm139 = vcmp.gt.f32.partialorder %v136, 0.0
    %v140 = vmul.f32 %v133, 0.01
    %v141 = vmul.f32 %v136, 0.01
    %v142 = vsel %vm138, %v133, %v140
    %v143 = vsel %vm139, %v136, %v141
    %144 = vset.pattern.permute.xlu0 59
    %145 = vperm.xlu0 %144, %v44
    %v146 = vpop.permute.xlu0 %145
    %148 = vrot.lane.b32.xlu0 %v44, 79
    %v149 = vpop.permute.xlu0 %148
    %vm150 = vcmask 80896
    %v151 = vsel %vm150, %v149, 0
    %vm153 = vcmask 1041408
    %v155 = vsel %vm153, %v143, 0
    %157 = vmatpush.msra.mxu0 0.0
    %158 = vmatpush.msra.mxu0 0.0
    %159 = vmatpush.msra.mxu0 0.0
    %160 = vmatpush.msra.mxu0 0.0
    %161 = vmatpush.msra.mxu0 0.0
    %162 = vmatpush.msra.mxu0 0.0
    %163 = vmatpush.msra.mxu0 0.0
    %164 = vmatpush.msra.mxu0 0.0
    %165 = vmatpush.msra.mxu0 0.0
    %166 = vmatpush.msra.mxu0 0.0
    %167 = vmatpush.msra.mxu0 0.0
    %168 = vmatpush.msra.mxu0 0.0
    %169 = vmatpush.msra.mxu0 0.0
    %170 = vmatpush.msra.mxu0 0.0
    %171 = vmatpush.msra.mxu0 %v155
    %172 = vmatpush.msra.mxu0 %v142
    %173 = vmatmul.f32.gmra.mxu0 %v151
    %v174 = vpop.f32.mrf.mxu0
    %v175 = vadd.f32 %v146, %v174
    %176 = vdwg.mxu0
    %177 = vst [vmem:[#allocation7] sm:$0x1] %v175
    // Predicated region
    $region18: #{tpu_custom_call.1} parent=1 // pred_check
      _
    $region19: #{tpu_custom_call.1} parent=1 // pred_check_branch
      %179 = sbr.rel (0) target = $region21
    $region20: #{tpu_custom_call.1} parent=1 // pred_region
      %181 = vsyncadd [#allocation4], 0
      %s183 = sshll.u32 [#allocation7], 4
      %s184 = int_to_ptr.vmem [resolvable:$true] %s183
      %s185 = sshll.u32 %s2, 4
      %s186 = int_to_ptr.hbm [resolvable:$true] %s185
      %188 = dma.vmem_to_hbm [thread:$0]  %s184, 16, %s186, [#allocation4]
    $region21: #{tpu_custom_call.1} parent=1 // pred_fallthru
      _
    // Predicated region
    $region22: #{tpu_custom_call.1} parent=1 // pred_check
      _
    $region23: #{tpu_custom_call.1} parent=1 // pred_check_branch
      %190 = sbr.rel (0) target = $region25
    $region24: #{tpu_custom_call.1} parent=1 // pred_region
      %192 = dma.done [#allocation4], 16
    $region25: #{tpu_custom_call.1} parent=1 // pred_fallthru
      _
    %193 = vsyncpa [#allocation3], 1
    %194 = vsyncpa [#allocation6], 1
    %195 = vsyncpa [#allocation4], 1

</llo_original>
